<compile_context>
chip_gen: v7x
topology: tpu7x:2x2x1
jax: 0.10.0
libtpu: 0.0.40
codegen_flags: <defaults>
</compile_context>

<pallas_src>
import functools

import jax
import jax.numpy as jnp
from jax import lax
from jax.experimental import pallas as pl
from jax.experimental.pallas import tpu as pltpu


def _cond_flow_kernel(z_ref, w_ref, bias_ref, o_ref, z_buf, p_buf, *, H, W, base):
    # z_ref   : (1, 2C, H*W)        concat([x, cond], dim=1), flattened NCHW
    # w_ref   : (Cpad, 9*2C)        im2col conv weight (rows >= Cout are 0)
    # bias_ref: (1, Cpad, 1)        fused bias: t*w_t + b_t + b_conv
    # o_ref   : (1, Cpad, H*W)      padded output block (sliced to Cout outside)
    # z_buf   : (2C, 2*base + H*W)  zero-margined staging buffer (f32)
    # p_buf   : (9*2C, H*W)         im2col patch matrix (f32)
    HW = H * W
    C2 = z_ref.shape[1]

    # Stage z between zero lane margins (the margins absorb the vertical SAME
    # padding). Re-zeroed every grid step on purpose: do NOT gate this on
    # program_id -- under "parallel" semantics each TensorCore has its own
    # scratch and the core running b=1 would never see the zeroing.
    z_buf[:, pl.ds(0, base)] = jnp.zeros((C2, base), jnp.float32)
    z_buf[:, pl.ds(base + HW, base)] = jnp.zeros((C2, base), jnp.float32)
    z_buf[:, pl.ds(base, HW)] = z_ref[0].astype(jnp.float32)

    # Horizontal (column) boundary masks, hoisted out of the tap loop
    # (one-sided compares, computed once per step).
    col = lax.broadcasted_iota(jnp.int32, (C2, HW), 1) % W
    mask_left = col >= 1           # source column wo-1 is inside the image
    mask_right = col <= W - 2      # source column wo+1 is inside the image

    # im2col: 9 statically shifted, lane-dense reads -> (9*2C, HW) patches.
    for tap in range(9):
        ky, kx = tap // 3 - 1, tap % 3 - 1
        s = ky * W + kx                                   # flat source shift
        zt = z_buf[:, pl.ds(base + s, HW)]                # (2C, HW)
        if kx == -1:
            zt = jnp.where(mask_left, zt, 0.0)
        elif kx == 1:
            zt = jnp.where(mask_right, zt, 0.0)
        p_buf[pl.ds(tap * C2, C2), :] = zt

    # Single MXU matmul over the full K = 9*2C contraction, plus fused bias.
    acc = jnp.dot(w_ref[...], p_buf[...], preferred_element_type=jnp.float32)
    o_ref[0] = (acc + bias_ref[0]).astype(o_ref.dtype)


def wrapper_cond_flow(t, x_nchw, cond_nchw, w_hwio, b_conv, w_t, b_t):
    """t: (B,); x_nchw/cond_nchw: (B, C, H, W) NCHW. Returns (B, Cout, H, W)."""
    B, C, H, W = x_nchw.shape
    Cout = w_hwio.shape[-1]
    HW = H * W
    C2 = 2 * C
    assert w_hwio.shape[:3] == (3, 3, C2)
    Cpad = max(8, ((Cout + 7) // 8) * 8)       # output channels -> full sublane tile
    base = max(8, pl.next_power_of_2(W + 1))   # lane margin of the staging buffer
    assert base >= W + 1, "margin must cover the max flat shift W+1 (no OOB reads)"

    # torch.cat([x, cond], dim=1) done once in the wrapper (tiny HBM copy),
    # then a free reshape of contiguous NCHW to the lane-dense (B, 2C, H*W).
    z = jnp.concatenate([x_nchw, cond_nchw], axis=1).reshape(B, C2, HW)

    # im2col weight: w_mat[o, tap*2C + c] = w_hwio[dy, dx, c, o], tap = dy*3+dx;
    # rows o >= Cout are zero-padded.
    w_mat = jnp.transpose(w_hwio.reshape(9, C2, Cout), (2, 0, 1)).reshape(Cout, 9 * C2)
    w_mat = jnp.pad(w_mat, ((0, Cpad - Cout), (0, 0))).astype(jnp.float32)

    # Fold the time embedding and conv bias into one per-batch channel bias.
    tb = t[:, None] * w_t[None, :] + b_t[None, :] + b_conv[None, :]       # (B, Cout)
    tb = jnp.pad(tb, ((0, 0), (0, Cpad - Cout))).reshape(B, Cpad, 1)
    tb = tb.astype(jnp.float32)

    kernel = functools.partial(_cond_flow_kernel, H=H, W=W, base=base)

    out_pad = pl.pallas_call(
        kernel,
        out_shape=jax.ShapeDtypeStruct((B, Cpad, HW), x_nchw.dtype),
        grid_spec=pltpu.PrefetchScalarGridSpec(
            num_scalar_prefetch=0,
            grid=(B,),
            in_specs=[
                pl.BlockSpec((1, C2, HW), lambda b: (b, 0, 0)),        # [x, cond]
                pl.BlockSpec((Cpad, 9 * C2), lambda b: (0, 0)),        # im2col weight
                pl.BlockSpec((1, Cpad, 1), lambda b: (b, 0, 0)),       # fused bias
            ],
            out_specs=pl.BlockSpec((1, Cpad, HW), lambda b: (b, 0, 0)),
            scratch_shapes=[
                pltpu.VMEM((C2, 2 * base + HW), jnp.float32),          # z staging
                pltpu.VMEM((9 * C2, HW), jnp.float32),                 # im2col patches
            ],
        ),
        # grid=(B,) "parallel" feeds both TensorCores on v7x; on single-TC
        # v5e/v6e it is a 2-step sequential loop (~0.35us extra at this size).
        compiler_params=pltpu.CompilerParams(dimension_semantics=("parallel",)),
    )(z, w_mat, tb)

    # Slice the sublane padding away; free reshape back to PyTorch NCHW.
    return out_pad[:, :Cout, :].reshape(B, Cout, H, W)


def reference(t, x_nchw, cond_nchw, w_hwio, b_conv, w_t, b_t):
    """Pure-JAX reference mirroring WrapperCondFlow semantics."""
    z = jnp.concatenate([x_nchw, cond_nchw], axis=1)          # cat along channel
    zh = jnp.transpose(z, (0, 2, 3, 1))
    y = lax.conv_general_dilated(
        zh, w_hwio, window_strides=(1, 1), padding='SAME',
        dimension_numbers=('NHWC', 'HWIO', 'NHWC'))
    tb = t[:, None] * w_t[None, :] + b_t[None, :] + b_conv[None, :]
    y = y + tb[:, None, None, :]
    return jnp.transpose(y, (0, 3, 1, 2))


if __name__ == "__main__":
    B, C, H, W = 2, 4, 16, 16
    Cin, Cout = 2 * C, C

    key = jax.random.PRNGKey(0)
    k_x, k_c, k_t, k_w, k_b, k_wt, k_bt = jax.random.split(key, 7)

    x = jax.random.normal(k_x, (B, C, H, W), dtype=jnp.float32)       # flow state
    cond = jax.random.normal(k_c, (B, C, H, W), dtype=jnp.float32)    # self.cond
    t = jax.random.uniform(k_t, (B,), dtype=jnp.float32)              # flow time

    # deterministic synthetic "model" parameters
    w_hwio = 0.1 * jax.random.normal(k_w, (3, 3, Cin, Cout), dtype=jnp.float32)
    b_conv = 0.1 * jax.random.normal(k_b, (Cout,), dtype=jnp.float32)
    w_t = 0.1 * jax.random.normal(k_wt, (Cout,), dtype=jnp.float32)
    b_t = 0.1 * jax.random.normal(k_bt, (Cout,), dtype=jnp.float32)

    out = wrapper_cond_flow(t, x, cond, w_hwio, b_conv, w_t, b_t)
    out = jax.block_until_ready(out)

    ref = reference(t, x, cond, w_hwio, b_conv, w_t, b_t)
    assert out.shape == (B, Cout, H, W)
    assert jnp.allclose(out, ref, atol=1e-4, rtol=1e-4), float(jnp.max(jnp.abs(out - ref)))

    print("KERNEL_OK")
</pallas_src>

<mosaic_0001>
module attributes {stable_mosaic.version = 11 : i64} {
  func.func @_cond_flow_kernel(%arg0: i32, %arg1: memref<1x8x256xf32, #tpu.memory_space<vmem>>, %arg2: memref<8x72xf32, #tpu.memory_space<vmem>>, %arg3: memref<1x8x1xf32, #tpu.memory_space<vmem>>, %arg4: memref<1x8x256xf32, #tpu.memory_space<vmem>>, %arg5: memref<8x320xf32, #tpu.memory_space<vmem>>, %arg6: memref<72x256xf32, #tpu.memory_space<vmem>>) attributes {dimension_semantics = [#tpu.dimension_semantics<parallel>], iteration_bounds = array<i64: 2>, scalar_prefetch = 0 : i64, scratch_operands = 2 : i64, tpu.core_type = #tpu.core_type<tc>, window_params = [{transform_indices = @transform_0, window_bounds = array<i64: 1, 8, 256>}, {pipeline_mode = #tpu.pipeline_mode<synchronous>, transform_indices = @transform_1, window_bounds = array<i64: 8, 72>}, {transform_indices = @transform_2, window_bounds = array<i64: 1, 8, 1>}, {transform_indices = @transform_3, window_bounds = array<i64: 1, 8, 256>}]} {
    %cst = arith.constant 0.000000e+00 : f32
    %0 = vector.broadcast %cst : f32 to vector<8x32xf32>
    %c0 = arith.constant 0 : index
    %c0_0 = arith.constant 0 : index
    %1 = vector.load %arg5[%c0, %c0_0] : memref<8x320xf32, #tpu.memory_space<vmem>>, vector<8x32xf32>
    tpu.vector_store %arg5[%c0, %c0_0], %0 {strides = array<i32>} : memref<8x320xf32, #tpu.memory_space<vmem>>, vector<8x32xf32>,
    %cst_1 = arith.constant 0.000000e+00 : f32
    %2 = vector.broadcast %cst_1 : f32 to vector<8x32xf32>
    %c0_2 = arith.constant 0 : index
    %c288 = arith.constant 288 : index
    %3 = vector.load %arg5[%c0_2, %c288] : memref<8x320xf32, #tpu.memory_space<vmem>>, vector<8x32xf32>
    tpu.vector_store %arg5[%c0_2, %c288], %2 {strides = array<i32>} : memref<8x320xf32, #tpu.memory_space<vmem>>, vector<8x32xf32>,
    %c0_3 = arith.constant 0 : index
    %c0_4 = arith.constant 0 : index
    %c0_5 = arith.constant 0 : index
    %4 = vector.load %arg1[%c0_3, %c0_4, %c0_5] : memref<1x8x256xf32, #tpu.memory_space<vmem>>, vector<1x8x256xf32>
    %5 = vector.shape_cast %4 : vector<1x8x256xf32> to vector<8x256xf32>
    %c0_6 = arith.constant 0 : index
    %c32 = arith.constant 32 : index
    %6 = vector.load %arg5[%c0_6, %c32] : memref<8x320xf32, #tpu.memory_space<vmem>>, vector<8x256xf32>
    tpu.vector_store %arg5[%c0_6, %c32], %5 {strides = array<i32>} : memref<8x320xf32, #tpu.memory_space<vmem>>, vector<8x256xf32>,
    %7 = tpu.iota {dimensions = array<i32: 1>} : vector<8x256xi32>
    %c16_i32 = arith.constant 16 : i32
    %c0_i32 = arith.constant 0 : i32
    %8 = arith.cmpi eq, %c16_i32, %c0_i32 : i32
    %c1_i32 = arith.constant 1 : i32
    %9 = arith.select %8, %c1_i32, %c16_i32 : i32
    %10 = vector.broadcast %9 : i32 to vector<8x256xi32>
    %11 = arith.remsi %7, %10 : vector<8x256xi32>
    %c0_i32_7 = arith.constant 0 : i32
    %12 = vector.broadcast %c0_i32_7 : i32 to vector<8x256xi32>
    %13 = arith.cmpi ne, %11, %12 : vector<8x256xi32>
    %c0_i32_8 = arith.constant 0 : i32
    %14 = vector.broadcast %c0_i32_8 : i32 to vector<8x256xi32>
    %15 = arith.cmpi slt, %11, %14 : vector<8x256xi32>
    %c0_i32_9 = arith.constant 0 : i32
    %16 = arith.cmpi slt, %9, %c0_i32_9 : i32
    %17 = vector.broadcast %16 : i1 to vector<8x256xi1>
    %18 = vector.broadcast %17 : vector<8x256xi1> to vector<8x256xi1>
    %19 = arith.xori %15, %18 : vector<8x256xi1>
    %20 = arith.andi %19, %13 : vector<8x256xi1>
    %21 = vector.broadcast %9 : i32 to vector<8x256xi32>
    %22 = arith.addi %11, %21 : vector<8x256xi32>
    %23 = arith.select %20, %22, %11 : vector<8x256xi1>, vector<8x256xi32>
    %c1_i32_10 = arith.constant 1 : i32
    %24 = vector.broadcast %c1_i32_10 : i32 to vector<8x256xi32>
    %25 = arith.cmpi sge, %23, %24 : vector<8x256xi32>
    %c14_i32 = arith.constant 14 : i32
    %26 = vector.broadcast %c14_i32 : i32 to vector<8x256xi32>
    %27 = arith.cmpi sle, %23, %26 : vector<8x256xi32>
    %c0_11 = arith.constant 0 : index
    %c15 = arith.constant 15 : index
    %28 = vector.load %arg5[%c0_11, %c15] : memref<8x320xf32, #tpu.memory_space<vmem>>, vector<8x256xf32>
    %cst_12 = arith.constant 0.000000e+00 : f32
    %29 = vector.broadcast %cst_12 : f32 to vector<8x256xf32>
    %30 = arith.select %25, %28, %29 : vector<8x256xi1>, vector<8x256xf32>
    %c0_13 = arith.constant 0 : index
    %c0_14 = arith.constant 0 : index
    %31 = vector.load %arg6[%c0_13, %c0_14] : memref<72x256xf32, #tpu.memory_space<vmem>>, vector<8x256xf32>
    tpu.vector_store %arg6[%c0_13, %c0_14], %30 {strides = array<i32>} : memref<72x256xf32, #tpu.memory_space<vmem>>, vector<8x256xf32>,
    %c0_15 = arith.constant 0 : index
    %c16 = arith.constant 16 : index
    %32 = vector.load %arg5[%c0_15, %c16] : memref<8x320xf32, #tpu.memory_space<vmem>>, vector<8x256xf32>
    %c8 = arith.constant 8 : index
    %c0_16 = arith.constant 0 : index
    %33 = vector.load %arg6[%c8, %c0_16] : memref<72x256xf32, #tpu.memory_space<vmem>>, vector<8x256xf32>
    tpu.vector_store %arg6[%c8, %c0_16], %32 {strides = array<i32>} : memref<72x256xf32, #tpu.memory_space<vmem>>, vector<8x256xf32>,
    %c0_17 = arith.constant 0 : index
    %c17 = arith.constant 17 : index
    %34 = vector.load %arg5[%c0_17, %c17] : memref<8x320xf32, #tpu.memory_space<vmem>>, vector<8x256xf32>
    %cst_18 = arith.constant 0.000000e+00 : f32
    %35 = vector.broadcast %cst_18 : f32 to vector<8x256xf32>
    %36 = arith.select %27, %34, %35 : vector<8x256xi1>, vector<8x256xf32>
    %c16_19 = arith.constant 16 : index
    %c0_20 = arith.constant 0 : index
    %37 = vector.load %arg6[%c16_19, %c0_20] : memref<72x256xf32, #tpu.memory_space<vmem>>, vector<8x256xf32>
    tpu.vector_store %arg6[%c16_19, %c0_20], %36 {strides = array<i32>} : memref<72x256xf32, #tpu.memory_space<vmem>>, vector<8x256xf32>,
    %c0_21 = arith.constant 0 : index
    %c31 = arith.constant 31 : index
    %38 = vector.load %arg5[%c0_21, %c31] : memref<8x320xf32, #tpu.memory_space<vmem>>, vector<8x256xf32>
    %cst_22 = arith.constant 0.000000e+00 : f32
    %39 = vector.broadcast %cst_22 : f32 to vector<8x256xf32>
    %40 = arith.select %25, %38, %39 : vector<8x256xi1>, vector<8x256xf32>
    %c24 = arith.constant 24 : index
    %c0_23 = arith.constant 0 : index
    %41 = vector.load %arg6[%c24, %c0_23] : memref<72x256xf32, #tpu.memory_space<vmem>>, vector<8x256xf32>
    tpu.vector_store %arg6[%c24, %c0_23], %40 {strides = array<i32>} : memref<72x256xf32, #tpu.memory_space<vmem>>, vector<8x256xf32>,
    %c0_24 = arith.constant 0 : index
    %c32_25 = arith.constant 32 : index
    %42 = vector.load %arg5[%c0_24, %c32_25] : memref<8x320xf32, #tpu.memory_space<vmem>>, vector<8x256xf32>
    %c32_26 = arith.constant 32 : index
    %c0_27 = arith.constant 0 : index
    %43 = vector.load %arg6[%c32_26, %c0_27] : memref<72x256xf32, #tpu.memory_space<vmem>>, vector<8x256xf32>
    tpu.vector_store %arg6[%c32_26, %c0_27], %42 {strides = array<i32>} : memref<72x256xf32, #tpu.memory_space<vmem>>, vector<8x256xf32>,
    %c0_28 = arith.constant 0 : index
    %c33 = arith.constant 33 : index
    %44 = vector.load %arg5[%c0_28, %c33] : memref<8x320xf32, #tpu.memory_space<vmem>>, vector<8x256xf32>
    %cst_29 = arith.constant 0.000000e+00 : f32
    %45 = vector.broadcast %cst_29 : f32 to vector<8x256xf32>
    %46 = arith.select %27, %44, %45 : vector<8x256xi1>, vector<8x256xf32>
    %c40 = arith.constant 40 : index
    %c0_30 = arith.constant 0 : index
    %47 = vector.load %arg6[%c40, %c0_30] : memref<72x256xf32, #tpu.memory_space<vmem>>, vector<8x256xf32>
    tpu.vector_store %arg6[%c40, %c0_30], %46 {strides = array<i32>} : memref<72x256xf32, #tpu.memory_space<vmem>>, vector<8x256xf32>,
    %c0_31 = arith.constant 0 : index
    %c47 = arith.constant 47 : index
    %48 = vector.load %arg5[%c0_31, %c47] : memref<8x320xf32, #tpu.memory_space<vmem>>, vector<8x256xf32>
    %cst_32 = arith.constant 0.000000e+00 : f32
    %49 = vector.broadcast %cst_32 : f32 to vector<8x256xf32>
    %50 = arith.select %25, %48, %49 : vector<8x256xi1>, vector<8x256xf32>
    %c48 = arith.constant 48 : index
    %c0_33 = arith.constant 0 : index
    %51 = vector.load %arg6[%c48, %c0_33] : memref<72x256xf32, #tpu.memory_space<vmem>>, vector<8x256xf32>
    tpu.vector_store %arg6[%c48, %c0_33], %50 {strides = array<i32>} : memref<72x256xf32, #tpu.memory_space<vmem>>, vector<8x256xf32>,
    %c0_34 = arith.constant 0 : index
    %c48_35 = arith.constant 48 : index
    %52 = vector.load %arg5[%c0_34, %c48_35] : memref<8x320xf32, #tpu.memory_space<vmem>>, vector<8x256xf32>
    %c56 = arith.constant 56 : index
    %c0_36 = arith.constant 0 : index
    %53 = vector.load %arg6[%c56, %c0_36] : memref<72x256xf32, #tpu.memory_space<vmem>>, vector<8x256xf32>
    tpu.vector_store %arg6[%c56, %c0_36], %52 {strides = array<i32>} : memref<72x256xf32, #tpu.memory_space<vmem>>, vector<8x256xf32>,
    %c0_37 = arith.constant 0 : index
    %c49 = arith.constant 49 : index
    %54 = vector.load %arg5[%c0_37, %c49] : memref<8x320xf32, #tpu.memory_space<vmem>>, vector<8x256xf32>
    %cst_38 = arith.constant 0.000000e+00 : f32
    %55 = vector.broadcast %cst_38 : f32 to vector<8x256xf32>
    %56 = arith.select %27, %54, %55 : vector<8x256xi1>, vector<8x256xf32>
    %c64 = arith.constant 64 : index
    %c0_39 = arith.constant 0 : index
    %57 = vector.load %arg6[%c64, %c0_39] : memref<72x256xf32, #tpu.memory_space<vmem>>, vector<8x256xf32>
    tpu.vector_store %arg6[%c64, %c0_39], %56 {strides = array<i32>} : memref<72x256xf32, #tpu.memory_space<vmem>>, vector<8x256xf32>,
    %c0_40 = arith.constant 0 : index
    %c0_41 = arith.constant 0 : index
    %58 = vector.load %arg2[%c0_40, %c0_41] : memref<8x72xf32, #tpu.memory_space<vmem>>, vector<8x72xf32>
    %c0_42 = arith.constant 0 : index
    %c0_43 = arith.constant 0 : index
    %59 = vector.load %arg6[%c0_42, %c0_43] : memref<72x256xf32, #tpu.memory_space<vmem>>, vector<72x256xf32>
    %cst_44 = arith.constant dense<0.000000e+00> : vector<8x256xf32>
    %60 = tpu.matmul %58, %59, %cst_44 {dimension_numbers = #tpu.dot_dimension_numbers<[1], [0], [0], [1], [0, 0, 1, 1], [], []>} : vector<8x72xf32>, vector<72x256xf32>, vector<8x256xf32> -> vector<8x256xf32>
    %c0_45 = arith.constant 0 : index
    %c0_46 = arith.constant 0 : index
    %c0_47 = arith.constant 0 : index
    %61 = vector.load %arg3[%c0_45, %c0_46, %c0_47] : memref<1x8x1xf32, #tpu.memory_space<vmem>>, vector<1x8x1xf32>
    %62 = vector.shape_cast %61 : vector<1x8x1xf32> to vector<8x1xf32>
    %63 = vector.broadcast %62 : vector<8x1xf32> to vector<8x256xf32>
    %64 = arith.addf %60, %63 : vector<8x256xf32>
    %c0_48 = arith.constant 0 : index
    %c0_49 = arith.constant 0 : index
    %c0_50 = arith.constant 0 : index
    %65 = vector.load %arg4[%c0_48, %c0_49, %c0_50] : memref<1x8x256xf32, #tpu.memory_space<vmem>>, vector<1x8x256xf32>
    %66 = vector.shape_cast %65 : vector<1x8x256xf32> to vector<8x256xf32>
    %67 = vector.shape_cast %64 : vector<8x256xf32> to vector<1x8x256xf32>
    tpu.vector_store %arg4[%c0_48, %c0_49, %c0_50], %67 {strides = array<i32>} : memref<1x8x256xf32, #tpu.memory_space<vmem>>, vector<1x8x256xf32>,
    return
  }
  func.func @transform_0(%arg0: i32) -> (i32, i32, i32) {
    %c0_i32 = arith.constant 0 : i32
    %c0_i32_0 = arith.constant 0 : i32
    %c0_i32_1 = arith.constant 0 : i32
    return %arg0, %c0_i32, %c0_i32_0 : i32, i32, i32
  }
  func.func @transform_1(%arg0: i32) -> (i32, i32) {
    %c0_i32 = arith.constant 0 : i32
    %c0_i32_0 = arith.constant 0 : i32
    %c0_i32_1 = arith.constant 0 : i32
    return %c0_i32, %c0_i32_0 : i32, i32
  }
  func.func @transform_2(%arg0: i32) -> (i32, i32, i32) {
    %c0_i32 = arith.constant 0 : i32
    %c0_i32_0 = arith.constant 0 : i32
    %c0_i32_1 = arith.constant 0 : i32
    return %arg0, %c0_i32, %c0_i32_0 : i32, i32, i32
  }
  func.func @transform_3(%arg0: i32) -> (i32, i32, i32) {
    %c0_i32 = arith.constant 0 : i32
    %c0_i32_0 = arith.constant 0 : i32
    %c0_i32_1 = arith.constant 0 : i32
    return %arg0, %c0_i32, %c0_i32_0 : i32, i32, i32
  }
}

</mosaic_0001>

<llo_original>
// kernel: tpu_custom_call.1
$region0: #{tpu_custom_call.1}
  #allocation0 [shape = 'u32[]', space=smem, size = 0x4, offset = 0x4, fixed_abs, tag = 'smem constant byte address 0x4 - core index']
  #allocation1 [shape = 'u32[144,128]{1,0:T(1,128)}', space=vmem, size = 0x12000, scoped, tag = 'internal scratch']
  #allocation2 [shape = 'f32[8,320]{1,0:T(8,128)}', space=vmem, size = 0x3000, scoped, tag = 'scratch operand']
  #allocation3 [shape = 'f32[72,256]{1,0:T(8,128)}', space=vmem, size = 0x12000, scoped, tag = 'scratch operand']
  %s0 = inlined_call_operand.hbm [shape: f32[2,8,256], index: 0, kind: input, shape index: {}]
  %s1 = inlined_call_operand.vmem [shape: f32[8,72], index: 1, kind: input, shape index: {}]
  %s2 = inlined_call_operand.vmem [shape: f32[2,8,1], index: 2, kind: input, shape index: {}]
  %s3 = inlined_call_operand.hbm [shape: f32[2,8,256], index: 3, kind: output, shape index: {}]
  %s4 = sld [smem:[#allocation0]]
  $region49: #{tpu_custom_call.1} parent=0
    _
  %s6 = ssub.s32 1, %s4
  %s7 = scalar_select 0, %s6, %s4
  $region1: #{tpu_custom_call.1} parent=0
    #allocation4 [shape = 'u8[16384]{0}', space=vmem, size = 0x4000, scoped, tag = 'input window, operand 0']
    #allocation5 [shape = 's32[2]{0}', space=sflag, size = 0x8, scoped, tag = 'scoped memory for tpu_custom_call.1']
    #allocation6 [shape = 's32[2]{0}', space=sflag, size = 0x8, scoped, tag = 'scoped memory for tpu_custom_call.1']
    #allocation7 [shape = 'u8[16384]{0}', space=vmem, size = 0x4000, scoped, tag = 'output window, operand 0']
    %8 = vsyncpa [#allocation5], 0
    %s9 = scalar_lea.sflag [#allocation5], 1
    %10 = vsyncpa %s9, 0
    %11 = vsyncpa [#allocation6], 0
    %s12 = scalar_lea.sflag [#allocation6], 1
    %13 = vsyncpa %s12, 0
    loop: start=0, step=1, limit=4
    $region2: #{tpu_custom_call.1} parent=1 // loop_pre_header
      _
    $region3: #{tpu_custom_call.1} parent=1 // loop_header
      %s15 = sphi 0, %s19
      %p16 = scmp.ge.s32.totalorder %s15, 4
      %s25 = sphi 0, %s27
      %s28 = sphi 0, %s25
      %s29 = sphi 0, %s28
      %s45 = sphi 0, %s29
      %s49 = sphi 0, %s49
      %s51 = sphi 0, %s49
      %s52 = sphi 0, %s51
      %s66 = sphi 0, %s52
      %s72 = sphi 0, %s74
      %s75 = sphi 0, %s72
      %s76 = sphi 0, %s75
      %s92 = sphi 0, %s76
      %s98 = sphi 0, %s100
      %s101 = sphi 0, %s98
      %s102 = sphi 0, %s101
      %s118 = sphi 0, %s102
    $region4: #{tpu_custom_call.1} parent=1 // loop_header_branch
      %18 = sbr.rel (%p16) target = $region8
    $region5: #{tpu_custom_call.1} parent=1 // loop_body
      %s20 = ssub.s32 %s15, 1
      %s21 = ssub.s32 %s15, 2
      %s22 = sadd.s32 %s15, 1
      %s23 = ssub.s32 %s15, %s22
      %p24 = scmp.eq.s32.totalorder %s23, 0
      %s26 = sadd.s32 %s25, 1
      %s27 = scalar_select %p24, %s25, %s26
      %p30 = pneg %p24
      %p31 = scmp.eq.s32.totalorder %s15, 1
      %p32 = por %p30, %p31
      %p33 = scmp.ne.s32.totalorder %s25, %s28
      %p34 = scmp.eq.s32.totalorder %s15, 0
      %p35 = por %p33, %p34
      %p36 = scmp.ne.s32.totalorder %s25, %s28
      %p37 = scmp.eq.s32.totalorder %s20, 1
      %p38 = por %p36, %p37
      %p39 = scmp.ne.s32.totalorder %s28, %s29
      %p40 = scmp.eq.s32.totalorder %s20, 0
      %p41 = por %p39, %p40
      %p42 = scmp.ne.s32.totalorder %s28, %s29
      %p43 = scmp.eq.s32.totalorder %s21, 1
      %p44 = por %p42, %p43
      %p46 = scmp.ne.s32.totalorder %s29, %s45
      %p47 = scmp.eq.s32.totalorder %s21, 0
      %p48 = por %p46, %p47
      %s50 = sadd.s32 %s49, 1
      %p53 = scmp.eq.s32.totalorder %s15, 1
      %p54 = scmp.ne.s32.totalorder %s49, %s51
      %p55 = scmp.eq.s32.totalorder %s15, 0
      %p56 = por %p54, %p55
      %p57 = scmp.ne.s32.totalorder %s49, %s51
      %p58 = scmp.eq.s32.totalorder %s20, 1
      %p59 = por %p57, %p58
      %p60 = scmp.ne.s32.totalorder %s51, %s52
      %p61 = scmp.eq.s32.totalorder %s20, 0
      %p62 = por %p60, %p61
      %p63 = scmp.ne.s32.totalorder %s51, %s52
      %p64 = scmp.eq.s32.totalorder %s21, 1
      %p65 = por %p63, %p64
      %p67 = scmp.ne.s32.totalorder %s52, %s66
      %p68 = scmp.eq.s32.totalorder %s21, 0
      %p69 = por %p67, %p68
      %s70 = ssub.s32 %s15, %s22
      %p71 = scmp.eq.s32.totalorder %s70, 0
      %s73 = sadd.s32 %s72, 1
      %s74 = scalar_select %p71, %s72, %s73
      %p77 = pneg %p71
      %p78 = scmp.eq.s32.totalorder %s15, 1
      %p79 = por %p77, %p78
      %p80 = scmp.ne.s32.totalorder %s72, %s75
      %p81 = scmp.eq.s32.totalorder %s15, 0
      %p82 = por %p80, %p81
      %p83 = scmp.ne.s32.totalorder %s72, %s75
      %p84 = scmp.eq.s32.totalorder %s20, 1
      %p85 = por %p83, %p84
      %p86 = scmp.ne.s32.totalorder %s75, %s76
      %p87 = scmp.eq.s32.totalorder %s20, 0
      %p88 = por %p86, %p87
      %p89 = scmp.ne.s32.totalorder %s75, %s76
      %p90 = scmp.eq.s32.totalorder %s21, 1
      %p91 = por %p89, %p90
      %p93 = scmp.ne.s32.totalorder %s76, %s92
      %p94 = scmp.eq.s32.totalorder %s21, 0
      %p95 = por %p93, %p94
      %s96 = ssub.s32 %s15, %s22
      %p97 = scmp.eq.s32.totalorder %s96, 0
      %s99 = sadd.s32 %s98, 1
      %s100 = scalar_select %p97, %s98, %s99
      %p103 = pneg %p97
      %p104 = scmp.eq.s32.totalorder %s15, 1
      %p105 = por %p103, %p104
      %p106 = scmp.ne.s32.totalorder %s98, %s101
      %p107 = scmp.eq.s32.totalorder %s15, 0
      %p108 = por %p106, %p107
      %p109 = scmp.ne.s32.totalorder %s98, %s101
      %p110 = scmp.eq.s32.totalorder %s20, 1
      %p111 = por %p109, %p110
      %p112 = scmp.ne.s32.totalorder %s101, %s102
      %p113 = scmp.eq.s32.totalorder %s20, 0
      %p114 = por %p112, %p113
      %p115 = scmp.ne.s32.totalorder %s101, %s102
      %p116 = scmp.eq.s32.totalorder %s21, 1
      %p117 = por %p115, %p116
      %p119 = scmp.ne.s32.totalorder %s102, %s118
      %p120 = scmp.eq.s32.totalorder %s21, 0
      %p121 = por %p119, %p120
      %p122 = scmp.le.s32.totalorder 1, %s15
      %p123 = scmp.lt.s32.totalorder %s15, 3
      %p124 = pnand %p122, %p123
      %p125 = pneg %p124
      // Predicated region
      $region9: #{tpu_custom_call.1} parent=5 // pred_check
        _
      $region10: #{tpu_custom_call.1} parent=5 // pred_check_branch
        %127 = sbr.rel (%p124) target = $region12
      $region11: #{tpu_custom_call.1} parent=5 // pred_region
        %s128 = ssub.s32 %s15, 1
        // Predicated region
        $region13: #{tpu_custom_call.1} parent=11 // pred_check
          %p129 = pneg %p62
        $region14: #{tpu_custom_call.1} parent=11 // pred_check_branch
          %131 = sbr.rel (%p129) target = $region16
        $region15: #{tpu_custom_call.1} parent=11 // pred_region
          _
        $region16: #{tpu_custom_call.1} parent=11 // pred_fallthru
          _
      $region12: #{tpu_custom_call.1} parent=5 // pred_fallthru
        _
      %p132 = scmp.lt.s32.totalorder %s15, 2
      // Predicated region
      $region17: #{tpu_custom_call.1} parent=5 // pred_check
        %p133 = pneg %p132
      $region18: #{tpu_custom_call.1} parent=5 // pred_check_branch
        %135 = sbr.rel (%p133) target = $region20
      $region19: #{tpu_custom_call.1} parent=5 // pred_region
        // Predicated region
        $region21: #{tpu_custom_call.1} parent=19 // pred_check
          %p136 = pneg %p35
        $region22: #{tpu_custom_call.1} parent=19 // pred_check_branch
          %138 = sbr.rel (%p136) target = $region24
        $region23: #{tpu_custom_call.1} parent=19 // pred_region
          %s139 = sand.u32 %s25, 1
          %s140 = scalar_lea.sflag [#allocation5], %s139
          %s141 = sand.u32 %s25, 1
          %s142 = smul.addr %s141, 16
          %s143 = scalar_lea.vmem [#allocation4], %s142
          %s145 = ssub.s32 256, 256
          %146 = vsyncadd %s140, %s145
          %s147 = smul.addr %s15, 2
          %s148 = smul.addr %s147, 128
          %s149 = scalar_lea.hbm %s0, %s148
          %s151 = sshll.u32 %s143, 4
          %s152 = int_to_ptr.vmem [resolvable:$true] %s151
          %154 = dma.hbm_to_vmem [thread:$0]  %s149, 256, %s152, %s140
        $region24: #{tpu_custom_call.1} parent=19 // pred_fallthru
          _
        // Predicated region
        $region25: #{tpu_custom_call.1} parent=19 // pred_check
          %p155 = pneg %p82
        $region26: #{tpu_custom_call.1} parent=19 // pred_check_branch
          %157 = sbr.rel (%p155) target = $region28
        $region27: #{tpu_custom_call.1} parent=19 // pred_region
          %p158 = scmp.lt.s32.totalorder %s15, 1
          %s159 = scalar_select %p158, %s15, 1
          %s160 = smul.addr %s159, 8
          %s161 = scalar_lea.vmem %s2, %s160
        $region28: #{tpu_custom_call.1} parent=19 // pred_fallthru
          _
      $region20: #{tpu_custom_call.1} parent=5 // pred_fallthru
        _
      %p162 = scmp.le.s32.totalorder 1, %s15
      %p163 = scmp.lt.s32.totalorder %s15, 3
      %p164 = pnand %p162, %p163
      %p165 = pneg %p164
      // Predicated region
      $region29: #{tpu_custom_call.1} parent=5 // pred_check
        _
      $region30: #{tpu_custom_call.1} parent=5 // pred_check_branch
        %167 = sbr.rel (%p164) target = $region32
      $region31: #{tpu_custom_call.1} parent=5 // pred_region
        %s168 = ssub.s32 %s15, 1
        %s169 = sand.u32 %s28, 1
        %s170 = scalar_lea.sflag [#allocation5], %s169
        %s171 = sand.u32 %s28, 1
        %s172 = smul.addr %s171, 16
        %s173 = scalar_lea.vmem [#allocation4], %s172
        // Predicated region
        $region33: #{tpu_custom_call.1} parent=31 // pred_check
          %p174 = pneg %p41
        $region34: #{tpu_custom_call.1} parent=31 // pred_check_branch
          %176 = sbr.rel (%p174) target = $region36
        $region35: #{tpu_custom_call.1} parent=31 // pred_region
          %177 = dma.done %s170, 256
        $region36: #{tpu_custom_call.1} parent=31 // pred_fallthru
          _
        %s178 = sand.u32 %s28, 1
        %s179 = scalar_lea.sflag [#allocation5], %s178
        %s180 = sand.u32 %s28, 1
        %s181 = smul.addr %s180, 16
        %s182 = scalar_lea.vmem [#allocation4], %s181
        %p183 = pneg %p41
        %p184 = pneg %p38
        %p185 = pneg %p62
        %p186 = pneg %p59
        %p187 = scmp.lt.s32.totalorder %s20, 1
        %s188 = scalar_select %p187, %s20, 1
        %s189 = smul.addr %s188, 8
        %s190 = scalar_lea.vmem %s2, %s189
        %p191 = pneg %p88
        %p192 = pneg %p85
        %p193 = pneg %p114
        %p194 = pneg %p111
        %s195 = sand.u32 %s101, 1
        %s196 = scalar_lea.sflag [#allocation6], %s195
        %s197 = sand.u32 %s101, 1
        %s198 = smul.addr %s197, 16
        %s199 = scalar_lea.vmem [#allocation7], %s198
        %p200 = scmp.lt.s32.totalorder %s20, 1
        %s201 = scalar_select %p200, %s20, 1
        %s202 = smul.addr %s201, 8
        %s203 = scalar_lea.vmem %s2, %s202
        %vm204 = vcmask 261120
        %205 = vst.msk [vmem:[#allocation2] sm:$0xff] %vm204, 0.0
        %vm206 = vcmask 523520
        %207 = vst.msk [vmem:[#allocation2 + $0x10] sm:$0xff] %vm206, 0.0
        %v208 = vld [vmem:[%s173] sm:$0xff]
        %v209 = vld [vmem:[%s173 + $0x8] sm:$0xff]
        %212 = vrot.lane.b32.xlu0 %v208, 32
        %v213 = vpop.permute.xlu0 %212
        %214 = vrot.lane.b32.xlu0 %v209, 32
        %v215 = vpop.permute.xlu0 %214
        %v216 = vsel %vm204, %v213, %v215
        %vm220 = vcmask 1047808
        %221 = vst.msk [vmem:[#allocation2] sm:$0xff] %vm220, %v213
        %222 = vst [vmem:[#allocation2 + $0x8] sm:$0xff] %v216
        %223 = vst.msk [vmem:[#allocation2 + $0x10] sm:$0xff] %vm204, %v215
        %v224 = vlaneseq
        %v225 = vand.u32 %v224, 127
        %v226 = vadd.s32 %v225, 128
        %vm227 = vcmp.lt.s32.totalorder %v225, 0
        %v228 = vsub.s32 0, %v225
        %v229 = vsel %vm227, %v228, %v225
        %v230 = vshrl.u32 %v229, 4
        %v231 = vand.u32 %v229, 15
        %v232 = vsub.s32 0, %v231
        %v233 = vsel %vm227, %v232, %v231
        %vm234 = vcmp.lt.s32.totalorder %v226, 0
        %v235 = vsub.s32 0, %v226
        %v236 = vsel %vm234, %v235, %v226
        %v237 = vshrl.u32 %v236, 4
        %v238 = vand.u32 %v236, 15
        %v239 = vsub.s32 0, %v238
        %v240 = vsel %vm234, %v239, %v238
        %vm241 = vcmp.ne.s32.totalorder %v233, 0
        %vm242 = vcmp.ne.s32.totalorder %v240, 0
        %vm243 = vcmp.lt.s32.totalorder %v233, 0
        %vm244 = vcmp.lt.s32.totalorder %v240, 0
        %vm245 = vmand %vm243, %vm241
        %vm246 = vmand %vm244, %vm242
        %v247 = vadd.s32 %v233, 16
        %v248 = vadd.s32 %v240, 16
        %v249 = vsel %vm245, %v247, %v233
        %v250 = vsel %vm246, %v248, %v240
        %vm251 = vcmp.ge.s32.totalorder %v249, 1
        %vm252 = vcmp.ge.s32.totalorder %v250, 1
        %vm253 = vcmp.le.s32.totalorder %v249, 14
        %vm254 = vcmp.le.s32.totalorder %v250, 14
        %v255 = vld [vmem:[#allocation2] sm:$0xff]
        %v256 = vld [vmem:[#allocation2 + $0x8] sm:$0xff]
        %v257 = vld [vmem:[#allocation2 + $0x10] sm:$0xff]
        %261 = vrot.lane.b32.xlu0 %v255, 113
        %v262 = vpop.permute.xlu0 %261
        %263 = vrot.lane.b32.xlu0 %v256, 113
        %v264 = vpop.permute.xlu0 %263
        %265 = vrot.lane.b32.xlu0 %v257, 113
        %v266 = vpop.permute.xlu0 %265
        %vm267 = vcmask 924672
        %v268 = vsel %vm267, %v262, %v264
        %v269 = vsel %vm267, %v264, %v266
        %v272 = vsel %vm251, %v268, 0.0
        %v273 = vsel %vm252, %v269, 0.0
        %274 = vst [vmem:[#allocation3] sm:$0xff] %v272
        %275 = vst [vmem:[#allocation3 + $0x8] sm:$0xff] %v273
        %v276 = vld [vmem:[#allocation2] sm:$0xff]
        %v277 = vld [vmem:[#allocation2 + $0x8] sm:$0xff]
        %v278 = vld [vmem:[#allocation2 + $0x10] sm:$0xff]
        %282 = vrot.lane.b32.xlu0 %v276, 112
        %v283 = vpop.permute.xlu0 %282
        %284 = vrot.lane.b32.xlu0 %v277, 112
        %v285 = vpop.permute.xlu0 %284
        %286 = vrot.lane.b32.xlu0 %v278, 112
        %v287 = vpop.permute.xlu0 %286
        %vm288 = vcmask 916480
        %v289 = vsel %vm288, %v283, %v285
        %v290 = vsel %vm288, %v285, %v287
        %293 = vst [vmem:[#allocation3 + $0x10] sm:$0xff] %v289
        %294 = vst [vmem:[#allocation3 + $0x18] sm:$0xff] %v290
        %v295 = vld [vmem:[#allocation2] sm:$0xff]
        %v296 = vld [vmem:[#allocation2 + $0x8] sm:$0xff]
        %v297 = vld [vmem:[#allocation2 + $0x10] sm:$0xff]
        %301 = vrot.lane.b32.xlu0 %v295, 111
        %v302 = vpop.permute.xlu0 %301
        %303 = vrot.lane.b32.xlu0 %v296, 111
        %v304 = vpop.permute.xlu0 %303
        %305 = vrot.lane.b32.xlu0 %v297, 111
        %v306 = vpop.permute.xlu0 %305
        %vm307 = vcmask 908288
        %v308 = vsel %vm307, %v302, %v304
        %v309 = vsel %vm307, %v304, %v306
        %v312 = vsel %vm253, %v308, 0.0
        %v313 = vsel %vm254, %v309, 0.0
        %314 = vst [vmem:[#allocation3 + $0x20] sm:$0xff] %v312
        %315 = vst [vmem:[#allocation3 + $0x28] sm:$0xff] %v313
        %v316 = vld [vmem:[#allocation2] sm:$0xff]
        %v317 = vld [vmem:[#allocation2 + $0x8] sm:$0xff]
        %v318 = vld [vmem:[#allocation2 + $0x10] sm:$0xff]
        %322 = vrot.lane.b32.xlu0 %v316, 97
        %v323 = vpop.permute.xlu0 %322
        %324 = vrot.lane.b32.xlu0 %v317, 97
        %v325 = vpop.permute.xlu0 %324
        %326 = vrot.lane.b32.xlu0 %v318, 97
        %v327 = vpop.permute.xlu0 %326
        %vm328 = vcmask 793600
        %v329 = vsel %vm328, %v323, %v325
        %v330 = vsel %vm328, %v325, %v327
        %v333 = vsel %vm251, %v329, 0.0
        %v334 = vsel %vm252, %v330, 0.0
        %335 = vst [vmem:[#allocation3 + $0x30] sm:$0xff] %v333
        %336 = vst [vmem:[#allocation3 + $0x38] sm:$0xff] %v334
        %v337 = vld [vmem:[#allocation2] sm:$0xff]
        %v338 = vld [vmem:[#allocation2 + $0x8] sm:$0xff]
        %v339 = vld [vmem:[#allocation2 + $0x10] sm:$0xff]
        %343 = vrot.lane.b32.xlu0 %v337, 96
        %v344 = vpop.permute.xlu0 %343
        %345 = vrot.lane.b32.xlu0 %v338, 96
        %v346 = vpop.permute.xlu0 %345
        %347 = vrot.lane.b32.xlu0 %v339, 96
        %v348 = vpop.permute.xlu0 %347
        %vm349 = vcmask 785408
        %v350 = vsel %vm349, %v344, %v346
        %v351 = vsel %vm349, %v346, %v348
        %354 = vst [vmem:[#allocation3 + $0x40] sm:$0xff] %v350
        %355 = vst [vmem:[#allocation3 + $0x48] sm:$0xff] %v351
        %v356 = vld [vmem:[#allocation2] sm:$0xff]
        %v357 = vld [vmem:[#allocation2 + $0x8] sm:$0xff]
        %v358 = vld [vmem:[#allocation2 + $0x10] sm:$0xff]
        %362 = vrot.lane.b32.xlu0 %v356, 95
        %v363 = vpop.permute.xlu0 %362
        %364 = vrot.lane.b32.xlu0 %v357, 95
        %v365 = vpop.permute.xlu0 %364
        %366 = vrot.lane.b32.xlu0 %v358, 95
        %v367 = vpop.permute.xlu0 %366
        %vm368 = vcmask 777216
        %v369 = vsel %vm368, %v363, %v365
        %v370 = vsel %vm368, %v365, %v367
        %v373 = vsel %vm253, %v369, 0.0
        %v374 = vsel %vm254, %v370, 0.0
        %375 = vst [vmem:[#allocation3 + $0x50] sm:$0xff] %v373
        %376 = vst [vmem:[#allocation3 + $0x58] sm:$0xff] %v374
        %v377 = vld [vmem:[#allocation2] sm:$0xff]
        %v378 = vld [vmem:[#allocation2 + $0x8] sm:$0xff]
        %v379 = vld [vmem:[#allocation2 + $0x10] sm:$0xff]
        %383 = vrot.lane.b32.xlu0 %v377, 81
        %v384 = vpop.permute.xlu0 %383
        %385 = vrot.lane.b32.xlu0 %v378, 81
        %v386 = vpop.permute.xlu0 %385
        %387 = vrot.lane.b32.xlu0 %v379, 81
        %v388 = vpop.permute.xlu0 %387
        %vm389 = vcmask 662528
        %v390 = vsel %vm389, %v384, %v386
        %v391 = vsel %vm389, %v386, %v388
        %v394 = vsel %vm251, %v390, 0.0
        %v395 = vsel %vm252, %v391, 0.0
        %396 = vst [vmem:[#allocation3 + $0x60] sm:$0xff] %v394
        %397 = vst [vmem:[#allocation3 + $0x68] sm:$0xff] %v395
        %v398 = vld [vmem:[#allocation2] sm:$0xff]
        %v399 = vld [vmem:[#allocation2 + $0x8] sm:$0xff]
        %v400 = vld [vmem:[#allocation2 + $0x10] sm:$0xff]
        %404 = vrot.lane.b32.xlu0 %v398, 80
        %v405 = vpop.permute.xlu0 %404
        %406 = vrot.lane.b32.xlu0 %v399, 80
        %v407 = vpop.permute.xlu0 %406
        %408 = vrot.lane.b32.xlu0 %v400, 80
        %v409 = vpop.permute.xlu0 %408
        %vm410 = vcmask 654336
        %v411 = vsel %vm410, %v405, %v407
        %v412 = vsel %vm410, %v407, %v409
        %415 = vst [vmem:[#allocation3 + $0x70] sm:$0xff] %v411
        %416 = vst [vmem:[#allocation3 + $0x78] sm:$0xff] %v412
        %v417 = vld [vmem:[#allocation2] sm:$0xff]
        %v418 = vld [vmem:[#allocation2 + $0x8] sm:$0xff]
        %v419 = vld [vmem:[#allocation2 + $0x10] sm:$0xff]
        %423 = vrot.lane.b32.xlu0 %v417, 79
        %v424 = vpop.permute.xlu0 %423
        %425 = vrot.lane.b32.xlu0 %v418, 79
        %v426 = vpop.permute.xlu0 %425
        %427 = vrot.lane.b32.xlu0 %v419, 79
        %v428 = vpop.permute.xlu0 %427
        %vm429 = vcmask 646144
        %v430 = vsel %vm429, %v424, %v426
        %v431 = vsel %vm429, %v426, %v428
        %v434 = vsel %vm253, %v430, 0.0
        %v435 = vsel %vm254, %v431, 0.0
        %436 = vst [vmem:[#allocation3 + $0x80] sm:$0xff] %v434
        %437 = vst [vmem:[#allocation3 + $0x88] sm:$0xff] %v435
        %v438 = vld [vmem:[%s1] sm:$0xff]
        %v439 = vld [vmem:[#allocation3] sm:$0xff]
        %v440 = vld [vmem:[#allocation3 + $0x8] sm:$0xff]
        %v441 = vld [vmem:[#allocation3 + $0x10] sm:$0xff]
        %v442 = vld [vmem:[#allocation3 + $0x18] sm:$0xff]
        %v443 = vld [vmem:[#allocation3 + $0x20] sm:$0xff]
        %v444 = vld [vmem:[#allocation3 + $0x28] sm:$0xff]
        %v445 = vld [vmem:[#allocation3 + $0x30] sm:$0xff]
        %v446 = vld [vmem:[#allocation3 + $0x38] sm:$0xff]
        %v447 = vld [vmem:[#allocation3 + $0x40] sm:$0xff]
        %v448 = vld [vmem:[#allocation3 + $0x48] sm:$0xff]
        %v449 = vld [vmem:[#allocation3 + $0x50] sm:$0xff]
        %v450 = vld [vmem:[#allocation3 + $0x58] sm:$0xff]
        %v451 = vld [vmem:[#allocation3 + $0x60] sm:$0xff]
        %v452 = vld [vmem:[#allocation3 + $0x68] sm:$0xff]
        %v453 = vld [vmem:[#allocation3 + $0x70] sm:$0xff]
        %v454 = vld [vmem:[#allocation3 + $0x78] sm:$0xff]
        %v455 = vld [vmem:[#allocation3 + $0x80] sm:$0xff]
        %v456 = vld [vmem:[#allocation3 + $0x88] sm:$0xff]
        %v457 = vld [vmem:[%s203] sm:$0xff]
        %459 = vset.pattern.permute.xlu0 0
        %460 = vperm.xlu0 %459, %v457
        %v461 = vpop.permute.xlu0 %460
        %vm463 = vcmask 588800
        %v465 = vsel %vm463, %v438, 0
        %467 = vmatprep.subr.mxu0 %v440
        %468 = vmatpush1.msra.mxu0 %v439
        %469 = vmatprep.subr.mxu0 %v442
        %470 = vmatpush1.msra.mxu0 %v441
        %471 = vmatprep.subr.mxu0 %v444
        %472 = vmatpush1.msra.mxu0 %v443
        %473 = vmatprep.subr.mxu0 %v446
        %474 = vmatpush1.msra.mxu0 %v445
        %475 = vmatprep.subr.mxu0 %v448
        %476 = vmatpush1.msra.mxu0 %v447
        %477 = vmatprep.subr.mxu0 %v450
        %478 = vmatpush1.msra.mxu0 %v449
        %479 = vmatprep.subr.mxu0 %v452
        %480 = vmatpush1.msra.mxu0 %v451
        %481 = vmatprep.subr.mxu0 %v454
        %482 = vmatpush1.msra.mxu0 %v453
        %483 = vmatprep.subr.mxu0 %v456
        %484 = vmatpush1.msra.mxu0 %v455
        %485 = vmatprep.subr.mxu0 0.0
        %486 = vmatpush1.msra.mxu0 0.0
        %487 = vmatprep.subr.mxu0 0.0
        %488 = vmatpush1.msra.mxu0 0.0
        %489 = vmatprep.subr.mxu0 0.0
        %490 = vmatpush1.msra.mxu0 0.0
        %491 = vmatprep.subr.mxu0 0.0
        %492 = vmatpush1.msra.mxu0 0.0
        %493 = vmatprep.subr.mxu0 0.0
        %494 = vmatpush1.msra.mxu0 0.0
        %495 = vmatprep.subr.mxu0 0.0
        %496 = vmatpush1.msra.mxu0 0.0
        %497 = vmatprep.subr.mxu0 0.0
        %498 = vmatpush1.msra.mxu0 0.0
        %499 = vmatprep.subr.mxu0 0.0
        %500 = vmatpush1.msra.mxu0 0.0
        %501 = vmatprep.subr.mxu0 0.0
        %502 = vmatpush1.msra.mxu0 0.0
        %503 = vmatprep.subr.mxu0 0.0
        %504 = vmatpush1.msra.mxu0 0.0
        %505 = vmatprep.subr.mxu0 0.0
        %506 = vmatpush1.msra.mxu0 0.0
        %507 = vmatprep.subr.mxu0 0.0
        %508 = vmatpush1.msra.mxu0 0.0
        %509 = vmatprep.subr.mxu0 0.0
        %510 = vmatpush1.msra.mxu0 0.0
        %511 = vmatprep.subr.mxu0 0.0
        %512 = vmatpush1.msra.mxu0 0.0
        %513 = vmatprep.subr.mxu0 0.0
        %514 = vmatpush1.msra.mxu0 0.0
        %515 = vmatprep.subr.mxu0 0.0
        %516 = vmatpush1.msra.mxu0 0.0
        %517 = vmatprep.subr.mxu0 0.0
        %518 = vmatpush1.msra.mxu0 0.0
        %519 = vmatprep.subr.mxu0 0.0
        %520 = vmatpush1.msra.mxu0 0.0
        %521 = vmatprep.subr.mxu0 0.0
        %522 = vmatpush1.msra.mxu0 0.0
        %523 = vmatprep.subr.mxu0 0.0
        %524 = vmatpush1.msra.mxu0 0.0
        %525 = vmatprep.subr.mxu0 0.0
        %526 = vmatpush1.msra.mxu0 0.0
        %527 = vmatprep.subr.mxu0 0.0
        %528 = vmatpush1.msra.mxu0 0.0
        %529 = vmatprep.subr.mxu0 0.0
        %530 = vmatpush1.msra.mxu0 0.0
        %531 = vmatprep.mubr.f32.mxu0 0.0
        %532 = vmatmul.mubr.f32.gmra.mrb[0].mxu0 %v465
        %v533 = vpop.f32.mrb[0].mxu0
        %v534 = vadd.f32 %v461, %v533
        %v535 = vpop.f32.mrb[0].mxu0
        %v536 = vadd.f32 %v461, %v535
        %537 = vdwg.mxu0
        %538 = vst [vmem:[%s199] sm:$0xff] %v534
        %539 = vst [vmem:[%s199 + $0x8] sm:$0xff] %v536
        %s540 = sand.u32 %s101, 1
        %s541 = scalar_lea.sflag [#allocation6], %s540
        %s542 = sand.u32 %s101, 1
        %s543 = smul.addr %s542, 16
        %s544 = scalar_lea.vmem [#allocation7], %s543
        // Predicated region
        $region37: #{tpu_custom_call.1} parent=31 // pred_check
          %p545 = pneg %p111
        $region38: #{tpu_custom_call.1} parent=31 // pred_check_branch
          %547 = sbr.rel (%p545) target = $region40
        $region39: #{tpu_custom_call.1} parent=31 // pred_region
          %s549 = ssub.s32 256, 256
          %550 = vsyncadd %s541, %s549
          %s551 = smul.addr %s20, 2
          %s552 = smul.addr %s551, 128
          %s553 = scalar_lea.hbm %s3, %s552
          %s555 = sshll.u32 %s544, 4
          %s556 = int_to_ptr.vmem [resolvable:$true] %s555
          %558 = dma.vmem_to_hbm [thread:$0]  %s556, 256, %s553, %s541
        $region40: #{tpu_custom_call.1} parent=31 // pred_fallthru
          _
      $region32: #{tpu_custom_call.1} parent=5 // pred_fallthru
        _
      %p559 = scmp.le.s32.totalorder 2, %s15
      // Predicated region
      $region41: #{tpu_custom_call.1} parent=5 // pred_check
        %p560 = pneg %p559
      $region42: #{tpu_custom_call.1} parent=5 // pred_check_branch
        %562 = sbr.rel (%p560) target = $region44
      $region43: #{tpu_custom_call.1} parent=5 // pred_region
        %s563 = ssub.s32 %s15, 2
        // Predicated region
        $region45: #{tpu_custom_call.1} parent=43 // pred_check
          %p564 = pneg %p117
        $region46: #{tpu_custom_call.1} parent=43 // pred_check_branch
          %566 = sbr.rel (%p564) target = $region48
        $region47: #{tpu_custom_call.1} parent=43 // pred_region
          %s567 = sand.u32 %s102, 1
          %s568 = scalar_lea.sflag [#allocation6], %s567
          %s569 = sand.u32 %s102, 1
          %s570 = smul.addr %s569, 16
          %s571 = scalar_lea.vmem [#allocation7], %s570
          %572 = dma.done %s568, 256
        $region48: #{tpu_custom_call.1} parent=43 // pred_fallthru
          _
      $region44: #{tpu_custom_call.1} parent=5 // pred_fallthru
        _
    $region6: #{tpu_custom_call.1} parent=1 // loop_footer
      %s19 = sadd.s32 1, %s15
    $region7: #{tpu_custom_call.1} parent=1 // loop_footer_branch
      %14 = sbr.rel target = $region3
    $region8: #{tpu_custom_call.1} parent=1 // loop_exit
      _
    %573 = vsyncpa [#allocation5], 1
    %s574 = scalar_lea.sflag [#allocation5], 1
    %575 = vsyncpa %s574, 1
    %576 = vsyncpa [#allocation6], 1
    %s577 = scalar_lea.sflag [#allocation6], 1
    %578 = vsyncpa %s577, 1

</llo_original>
